<compile_context>
chip_gen: v5e
topology: v5e:2x2
jax: 0.10.0
libtpu: 0.0.40
codegen_flags: <defaults>
</compile_context>

<pallas_src>
import functools

import numpy as np
import jax
import jax.numpy as jnp
from jax.experimental import pallas as pl
from jax.experimental.pallas import tpu as pltpu


# ----------------------------- model sizes ---------------------------------
N_IN = 4                              # n_in_node
EDGE_TYPES = 2
MSG_HID = 16
MSG_OUT = 16
N_HID = 32
N_NODES = 8
N_EDGES = N_NODES * (N_NODES - 1)     # 56
BATCH = 2

FUSED = EDGE_TYPES * MSG_HID          # 32 (== EDGE_TYPES * MSG_OUT == N_HID)

# packed-weight row offsets (every segment starts on an 8-row tile boundary)
OFF_W1R, OFF_W1S, OFF_B1 = 0, 8, 16
OFF_W2, OFF_B2 = 24, 56
OFF_WO1X, OFF_WO1M, OFF_BO1 = 64, 72, 104
OFF_WO2, OFF_BO2 = 112, 144
OFF_WO3, OFF_BO3 = 152, 184
W_ROWS = 192


# ------------------------------- kernel ------------------------------------
def graph_decoder_kernel(x_ref, rt_ref, rr_ref, rs_ref, rrT_ref, w_ref, out_ref):
    """One step over the whole (batch-folded) problem.

    x_ref   : [B*N, D]        node features, batch folded into rows
    rt_ref  : [B*E, FUSED]    rel_type expanded per message block
    rr_ref  : [B*E, B*N]      block-diagonal rel_rec
    rs_ref  : [B*E, B*N]      block-diagonal rel_send
    rrT_ref : [B*N, B*E]      block-diagonal rel_rec, pre-transposed
    w_ref   : [W_ROWS, FUSED] packed weights/biases (8-row aligned segments)
    out_ref : [B*N, D]
    """
    f32 = jnp.float32
    dot = functools.partial(jnp.dot, preferred_element_type=f32)

    x = x_ref[...]                                        # [B*N, D]

    # static slices of the packed weight slab
    w1r = w_ref[OFF_W1R:OFF_W1R + N_IN, :]                # [D, 32]
    w1s = w_ref[OFF_W1S:OFF_W1S + N_IN, :]                # [D, 32]
    b1 = w_ref[OFF_B1:OFF_B1 + 1, :]                      # [1, 32]
    w2 = w_ref[OFF_W2:OFF_W2 + FUSED, :]                  # [32, 32] block-diag
    b2 = w_ref[OFF_B2:OFF_B2 + 1, :]                      # [1, 32]
    wo1x = w_ref[OFF_WO1X:OFF_WO1X + N_IN, :]             # [D, 32]
    wo1m = w_ref[OFF_WO1M:OFF_WO1M + FUSED, :]            # [32, 32] = [wo1m; wo1m]
    bo1 = w_ref[OFF_BO1:OFF_BO1 + 1, :]                   # [1, 32]
    wo2 = w_ref[OFF_WO2:OFF_WO2 + N_HID, :]               # [32, 32]
    bo2 = w_ref[OFF_BO2:OFF_BO2 + 1, :]                   # [1, 32]
    wo3 = w_ref[OFF_WO3:OFF_WO3 + N_HID, :]               # [32, 32], cols >= D zero
    bo3 = w_ref[OFF_BO3:OFF_BO3 + 1, :]                   # [1, 32], cols >= D zero

    # gather receiver / sender node features for every (batch, edge) row
    recv = dot(rr_ref[...], x)                            # [B*E, D]
    send = dot(rs_ref[...], x)                            # [B*E, D]

    # fused per-edge-type message MLP: both edge types in one 32-lane-wide pass
    h = jnp.maximum(dot(recv, w1r) + dot(send, w1s) + b1, 0.0)   # [B*E, 32]
    m = jnp.maximum(dot(h, w2) + b2, 0.0)                        # [B*E, 32]
    m = m * rt_ref[...]                                          # rel_type weighting

    # aggregate messages per receiving node; per-type blocks stay separate and
    # the sum over edge types is folded into the row-stacked wo1m matmul below
    agg = dot(rrT_ref[...], m)                            # [B*N, 32]

    # output MLP on [inputs, agg_msgs]
    h1 = jnp.maximum(dot(x, wo1x) + dot(agg, wo1m) + bo1, 0.0)   # [B*N, 32]
    h2 = jnp.maximum(dot(h1, wo2) + bo2, 0.0)                    # [B*N, 32]
    pred = dot(h2, wo3) + bo3                             # [B*N, 32]; cols >= D are 0

    out_ref[...] = (x + pred[:, : x.shape[1]]).astype(out_ref.dtype)


# ------------------------------ wrapper -------------------------------------
def graph_decoder_forward(inputs, rel_type, rel_rec, rel_send, w_packed):
    B, N, D = inputs.shape
    E = rel_rec.shape[0]
    BN, BE = B * N, B * E

    # wrapper-side layout plumbing (all tiny): fold batch into rows.
    x_flat = inputs.reshape(BN, D)
    # expanded rel_type mask matching the fused per-type message blocks
    rt_exp = jnp.repeat(rel_type, MSG_OUT, axis=-1).reshape(BE, FUSED)
    eye_b = jnp.eye(B, dtype=inputs.dtype)
    rr_bd = jnp.kron(eye_b, rel_rec)                      # [B*E, B*N]
    rs_bd = jnp.kron(eye_b, rel_send)                     # [B*E, B*N]
    rr_bd_t = rr_bd.T                                     # [B*N, B*E]

    flops = 2 * (2 * BE * BN * D + 2 * BE * D * FUSED + BE * FUSED * FUSED
                 + BN * BE * FUSED + BN * D * FUSED + 3 * BN * FUSED * FUSED)
    bytes_accessed = 4 * (2 * BN * D + BE * FUSED + 2 * BE * BN + BN * BE
                          + W_ROWS * FUSED)

    full = lambda s: pl.BlockSpec(s, lambda i: (0,) * len(s))

    out_flat = pl.pallas_call(
        graph_decoder_kernel,
        out_shape=jax.ShapeDtypeStruct((BN, D), inputs.dtype),
        grid=(1,),   # single step: the whole problem fits in VMEM many times over
        in_specs=[
            full((BN, D)),
            full((BE, FUSED)),
            full((BE, BN)),
            full((BE, BN)),
            full((BN, BE)),
            full((W_ROWS, FUSED)),
        ],
        out_specs=full((BN, D)),
        compiler_params=pltpu.CompilerParams(
            dimension_semantics=("arbitrary",)),
        cost_estimate=pl.CostEstimate(flops=flops, transcendentals=0,
                                      bytes_accessed=bytes_accessed),
    )(x_flat, rt_exp, rr_bd, rs_bd, rr_bd_t, w_packed)

    return out_flat.reshape(B, N, D)


# ---------------------- deterministic parameter init ------------------------
def _linear_params(key, fan_in, fan_out):
    """PyTorch nn.Linear default init: U(-1/sqrt(fan_in), 1/sqrt(fan_in))."""
    kw, kb = jax.random.split(key)
    bound = 1.0 / np.sqrt(fan_in)
    w = jax.random.uniform(kw, (fan_out, fan_in), jnp.float32, -bound, bound)
    b = jax.random.uniform(kb, (fan_out,), jnp.float32, -bound, bound)
    return w, b


def make_params(key):
    keys = jax.random.split(key, 2 * EDGE_TYPES + 3)
    msg_fc1 = [_linear_params(keys[2 * i], 2 * N_IN, MSG_HID) for i in range(EDGE_TYPES)]
    msg_fc2 = [_linear_params(keys[2 * i + 1], MSG_HID, MSG_OUT) for i in range(EDGE_TYPES)]
    out_fc1 = _linear_params(keys[-3], N_IN + MSG_OUT, N_HID)
    out_fc2 = _linear_params(keys[-2], N_HID, N_HID)
    out_fc3 = _linear_params(keys[-1], N_HID, N_IN)
    return dict(msg_fc1=msg_fc1, msg_fc2=msg_fc2,
                out_fc1=out_fc1, out_fc2=out_fc2, out_fc3=out_fc3)


def pack_params(params):
    """Pack all weights/biases into a single [W_ROWS, FUSED] f32 slab."""
    w1r, w1s, b1, w2b, b2 = [], [], [], [], []
    for i in range(EDGE_TYPES):
        w, b = params["msg_fc1"][i]          # [MSG_HID, 2*N_IN]
        wt = w.T                             # [2*N_IN, MSG_HID]
        w1r.append(wt[:N_IN]); w1s.append(wt[N_IN:]); b1.append(b)
        w, b = params["msg_fc2"][i]          # [MSG_OUT, MSG_HID]
        w2b.append(w.T); b2.append(b)

    w1r_all = jnp.concatenate(w1r, axis=1)                 # [N_IN, FUSED]
    w1s_all = jnp.concatenate(w1s, axis=1)                 # [N_IN, FUSED]
    b1_all = jnp.concatenate(b1)[None, :]                  # [1, FUSED]
    w2_bd = jnp.zeros((FUSED, FUSED), jnp.float32)
    for i in range(EDGE_TYPES):
        w2_bd = w2_bd.at[i * MSG_HID:(i + 1) * MSG_HID,
                         i * MSG_OUT:(i + 1) * MSG_OUT].set(w2b[i])
    b2_all = jnp.concatenate(b2)[None, :]                  # [1, FUSED]

    wo1, bo1 = params["out_fc1"]                           # [N_HID, N_IN+MSG_OUT]
    wo1t = wo1.T
    wo1x, wo1m = wo1t[:N_IN], wo1t[N_IN:]                  # [4,32], [16,32]
    wo1m_stacked = jnp.concatenate([wo1m] * EDGE_TYPES, axis=0)   # [32,32]
    wo2, bo2 = params["out_fc2"]
    wo3, bo3 = params["out_fc3"]                           # [N_IN, N_HID]
    wo3_pad = jnp.zeros((N_HID, FUSED), jnp.float32).at[:, :N_IN].set(wo3.T)
    bo3_pad = jnp.zeros((1, FUSED), jnp.float32).at[:, :N_IN].set(bo3[None, :])

    W = jnp.zeros((W_ROWS, FUSED), jnp.float32)
    W = W.at[OFF_W1R:OFF_W1R + N_IN].set(w1r_all)
    W = W.at[OFF_W1S:OFF_W1S + N_IN].set(w1s_all)
    W = W.at[OFF_B1:OFF_B1 + 1].set(b1_all)
    W = W.at[OFF_W2:OFF_W2 + FUSED].set(w2_bd)
    W = W.at[OFF_B2:OFF_B2 + 1].set(b2_all)
    W = W.at[OFF_WO1X:OFF_WO1X + N_IN].set(wo1x)
    W = W.at[OFF_WO1M:OFF_WO1M + FUSED].set(wo1m_stacked)
    W = W.at[OFF_BO1:OFF_BO1 + 1].set(bo1[None, :])
    W = W.at[OFF_WO2:OFF_WO2 + N_HID].set(wo2.T)
    W = W.at[OFF_BO2:OFF_BO2 + 1].set(bo2[None, :])
    W = W.at[OFF_WO3:OFF_WO3 + N_HID].set(wo3_pad)
    W = W.at[OFF_BO3:OFF_BO3 + 1].set(bo3_pad)
    return W


# --------------------------- pure-JAX reference ------------------------------
def reference_forward(inputs, rel_type, rel_rec, rel_send, params):
    """Direct transcription of GraphDecoder.single_step_forward (do_prob=0)."""
    recv = jnp.einsum("en,bnd->bed", rel_rec, inputs)
    send = jnp.einsum("en,bnd->bed", rel_send, inputs)
    pre_msg = jnp.concatenate([recv, send], axis=-1)
    all_msgs = jnp.zeros((inputs.shape[0], rel_rec.shape[0], MSG_OUT), jnp.float32)
    for i in range(EDGE_TYPES):
        w1, b1 = params["msg_fc1"][i]
        w2, b2 = params["msg_fc2"][i]
        msg = jnp.maximum(pre_msg @ w1.T + b1, 0.0)
        msg = jnp.maximum(msg @ w2.T + b2, 0.0)
        all_msgs = all_msgs + msg * rel_type[:, :, i:i + 1]
    agg = jnp.einsum("en,bem->bnm", rel_rec, all_msgs)
    aug = jnp.concatenate([inputs, agg], axis=-1)
    wo1, bo1 = params["out_fc1"]
    wo2, bo2 = params["out_fc2"]
    wo3, bo3 = params["out_fc3"]
    h = jnp.maximum(aug @ wo1.T + bo1, 0.0)
    h = jnp.maximum(h @ wo2.T + bo2, 0.0)
    pred = h @ wo3.T + bo3
    return inputs + pred


# --------------------------------- main --------------------------------------
def make_rel_matrices(n_nodes):
    """Fully-connected graph (no self loops): E = N*(N-1) one-hot rows."""
    edges = [(r, s) for r in range(n_nodes) for s in range(n_nodes) if r != s]
    rec = np.zeros((len(edges), n_nodes), np.float32)
    snd = np.zeros((len(edges), n_nodes), np.float32)
    for e, (r, s) in enumerate(edges):
        rec[e, r] = 1.0
        snd[e, s] = 1.0
    return jnp.asarray(rec), jnp.asarray(snd)


if __name__ == "__main__":
    key = jax.random.PRNGKey(0)
    k_in, k_rt, k_par = jax.random.split(key, 3)

    inputs = jax.random.normal(k_in, (BATCH, N_NODES, N_IN), jnp.float32)
    rel_logits = jax.random.normal(k_rt, (BATCH, N_EDGES, EDGE_TYPES), jnp.float32)
    rel_type = jax.nn.softmax(rel_logits, axis=-1)
    rel_rec, rel_send = make_rel_matrices(N_NODES)
    params = make_params(k_par)
    w_packed = pack_params(params)

    fwd = jax.jit(graph_decoder_forward)
    out = fwd(inputs, rel_type, rel_rec, rel_send, w_packed)
    out = jax.block_until_ready(out)

    ref = reference_forward(inputs, rel_type, rel_rec, rel_send, params)
    assert out.shape == (BATCH, N_NODES, N_IN)
    assert jnp.allclose(out, ref, atol=1e-4, rtol=1e-4), "mismatch vs reference"

    print("KERNEL_OK")
</pallas_src>

<mosaic_0001>
module attributes {stable_mosaic.version = 11 : i64} {
  func.func @graph_decoder_kernel(%arg0: i32, %arg1: memref<16x4xf32, #tpu.memory_space<vmem>>, %arg2: memref<112x32xf32, #tpu.memory_space<vmem>>, %arg3: memref<112x16xf32, #tpu.memory_space<vmem>>, %arg4: memref<112x16xf32, #tpu.memory_space<vmem>>, %arg5: memref<16x112xf32, #tpu.memory_space<vmem>>, %arg6: memref<192x32xf32, #tpu.memory_space<vmem>>, %arg7: memref<16x4xf32, #tpu.memory_space<vmem>>) attributes {dimension_semantics = [#tpu.dimension_semantics<arbitrary>], iteration_bounds = array<i64: 1>, scalar_prefetch = 0 : i64, scratch_operands = 0 : i64, tpu.core_type = #tpu.core_type<tc>, window_params = [{pipeline_mode = #tpu.pipeline_mode<synchronous>, transform_indices = @transform_0, window_bounds = array<i64: 16, 4>}, {pipeline_mode = #tpu.pipeline_mode<synchronous>, transform_indices = @transform_1, window_bounds = array<i64: 112, 32>}, {pipeline_mode = #tpu.pipeline_mode<synchronous>, transform_indices = @transform_2, window_bounds = array<i64: 112, 16>}, {pipeline_mode = #tpu.pipeline_mode<synchronous>, transform_indices = @transform_3, window_bounds = array<i64: 112, 16>}, {pipeline_mode = #tpu.pipeline_mode<synchronous>, transform_indices = @transform_4, window_bounds = array<i64: 16, 112>}, {pipeline_mode = #tpu.pipeline_mode<synchronous>, transform_indices = @transform_5, window_bounds = array<i64: 192, 32>}, {pipeline_mode = #tpu.pipeline_mode<synchronous>, transform_indices = @transform_6, window_bounds = array<i64: 16, 4>}]} {
    %c0 = arith.constant 0 : index
    %c0_0 = arith.constant 0 : index
    %0 = vector.load %arg1[%c0, %c0_0] : memref<16x4xf32, #tpu.memory_space<vmem>>, vector<16x4xf32>
    %c0_1 = arith.constant 0 : index
    %c0_2 = arith.constant 0 : index
    %1 = vector.load %arg6[%c0_1, %c0_2] : memref<192x32xf32, #tpu.memory_space<vmem>>, vector<4x32xf32>
    %c8 = arith.constant 8 : index
    %c0_3 = arith.constant 0 : index
    %2 = vector.load %arg6[%c8, %c0_3] : memref<192x32xf32, #tpu.memory_space<vmem>>, vector<4x32xf32>
    %c16 = arith.constant 16 : index
    %c0_4 = arith.constant 0 : index
    %3 = vector.load %arg6[%c16, %c0_4] : memref<192x32xf32, #tpu.memory_space<vmem>>, vector<1x32xf32>
    %c24 = arith.constant 24 : index
    %c0_5 = arith.constant 0 : index
    %4 = vector.load %arg6[%c24, %c0_5] : memref<192x32xf32, #tpu.memory_space<vmem>>, vector<32x32xf32>
    %c56 = arith.constant 56 : index
    %c0_6 = arith.constant 0 : index
    %5 = vector.load %arg6[%c56, %c0_6] : memref<192x32xf32, #tpu.memory_space<vmem>>, vector<1x32xf32>
    %c64 = arith.constant 64 : index
    %c0_7 = arith.constant 0 : index
    %6 = vector.load %arg6[%c64, %c0_7] : memref<192x32xf32, #tpu.memory_space<vmem>>, vector<4x32xf32>
    %c72 = arith.constant 72 : index
    %c0_8 = arith.constant 0 : index
    %7 = vector.load %arg6[%c72, %c0_8] : memref<192x32xf32, #tpu.memory_space<vmem>>, vector<32x32xf32>
    %c104 = arith.constant 104 : index
    %c0_9 = arith.constant 0 : index
    %8 = vector.load %arg6[%c104, %c0_9] : memref<192x32xf32, #tpu.memory_space<vmem>>, vector<1x32xf32>
    %c112 = arith.constant 112 : index
    %c0_10 = arith.constant 0 : index
    %9 = vector.load %arg6[%c112, %c0_10] : memref<192x32xf32, #tpu.memory_space<vmem>>, vector<32x32xf32>
    %c144 = arith.constant 144 : index
    %c0_11 = arith.constant 0 : index
    %10 = vector.load %arg6[%c144, %c0_11] : memref<192x32xf32, #tpu.memory_space<vmem>>, vector<1x32xf32>
    %c152 = arith.constant 152 : index
    %c0_12 = arith.constant 0 : index
    %11 = vector.load %arg6[%c152, %c0_12] : memref<192x32xf32, #tpu.memory_space<vmem>>, vector<32x32xf32>
    %c184 = arith.constant 184 : index
    %c0_13 = arith.constant 0 : index
    %12 = vector.load %arg6[%c184, %c0_13] : memref<192x32xf32, #tpu.memory_space<vmem>>, vector<1x32xf32>
    %c0_14 = arith.constant 0 : index
    %c0_15 = arith.constant 0 : index
    %13 = vector.load %arg3[%c0_14, %c0_15] : memref<112x16xf32, #tpu.memory_space<vmem>>, vector<112x16xf32>
    %cst = arith.constant dense<0.000000e+00> : vector<112x4xf32>
    %14 = tpu.matmul %13, %0, %cst {dimension_numbers = #tpu.dot_dimension_numbers<[1], [0], [0], [1], [0, 0, 1, 1], [], []>} : vector<112x16xf32>, vector<16x4xf32>, vector<112x4xf32> -> vector<112x4xf32>
    %c0_16 = arith.constant 0 : index
    %c0_17 = arith.constant 0 : index
    %15 = vector.load %arg4[%c0_16, %c0_17] : memref<112x16xf32, #tpu.memory_space<vmem>>, vector<112x16xf32>
    %cst_18 = arith.constant dense<0.000000e+00> : vector<112x4xf32>
    %16 = tpu.matmul %15, %0, %cst_18 {dimension_numbers = #tpu.dot_dimension_numbers<[1], [0], [0], [1], [0, 0, 1, 1], [], []>} : vector<112x16xf32>, vector<16x4xf32>, vector<112x4xf32> -> vector<112x4xf32>
    %cst_19 = arith.constant dense<0.000000e+00> : vector<112x32xf32>
    %17 = tpu.matmul %14, %1, %cst_19 {dimension_numbers = #tpu.dot_dimension_numbers<[1], [0], [0], [1], [0, 0, 1, 1], [], []>} : vector<112x4xf32>, vector<4x32xf32>, vector<112x32xf32> -> vector<112x32xf32>
    %cst_20 = arith.constant dense<0.000000e+00> : vector<112x32xf32>
    %18 = tpu.matmul %16, %2, %cst_20 {dimension_numbers = #tpu.dot_dimension_numbers<[1], [0], [0], [1], [0, 0, 1, 1], [], []>} : vector<112x4xf32>, vector<4x32xf32>, vector<112x32xf32> -> vector<112x32xf32>
    %19 = arith.addf %17, %18 : vector<112x32xf32>
    %20 = vector.broadcast %3 : vector<1x32xf32> to vector<112x32xf32>
    %21 = arith.addf %19, %20 : vector<112x32xf32>
    %cst_21 = arith.constant 0.000000e+00 : f32
    %22 = vector.broadcast %cst_21 : f32 to vector<112x32xf32>
    %23 = arith.maximumf %21, %22 : vector<112x32xf32>
    %cst_22 = arith.constant dense<0.000000e+00> : vector<112x32xf32>
    %24 = tpu.matmul %23, %4, %cst_22 {dimension_numbers = #tpu.dot_dimension_numbers<[1], [0], [0], [1], [0, 0, 1, 1], [], []>} : vector<112x32xf32>, vector<32x32xf32>, vector<112x32xf32> -> vector<112x32xf32>
    %25 = vector.broadcast %5 : vector<1x32xf32> to vector<112x32xf32>
    %26 = arith.addf %24, %25 : vector<112x32xf32>
    %cst_23 = arith.constant 0.000000e+00 : f32
    %27 = vector.broadcast %cst_23 : f32 to vector<112x32xf32>
    %28 = arith.maximumf %26, %27 : vector<112x32xf32>
    %c0_24 = arith.constant 0 : index
    %c0_25 = arith.constant 0 : index
    %29 = vector.load %arg2[%c0_24, %c0_25] : memref<112x32xf32, #tpu.memory_space<vmem>>, vector<112x32xf32>
    %30 = arith.mulf %28, %29 : vector<112x32xf32>
    %c0_26 = arith.constant 0 : index
    %c0_27 = arith.constant 0 : index
    %31 = vector.load %arg5[%c0_26, %c0_27] : memref<16x112xf32, #tpu.memory_space<vmem>>, vector<16x112xf32>
    %cst_28 = arith.constant dense<0.000000e+00> : vector<16x32xf32>
    %32 = tpu.matmul %31, %30, %cst_28 {dimension_numbers = #tpu.dot_dimension_numbers<[1], [0], [0], [1], [0, 0, 1, 1], [], []>} : vector<16x112xf32>, vector<112x32xf32>, vector<16x32xf32> -> vector<16x32xf32>
    %cst_29 = arith.constant dense<0.000000e+00> : vector<16x32xf32>
    %33 = tpu.matmul %0, %6, %cst_29 {dimension_numbers = #tpu.dot_dimension_numbers<[1], [0], [0], [1], [0, 0, 1, 1], [], []>} : vector<16x4xf32>, vector<4x32xf32>, vector<16x32xf32> -> vector<16x32xf32>
    %cst_30 = arith.constant dense<0.000000e+00> : vector<16x32xf32>
    %34 = tpu.matmul %32, %7, %cst_30 {dimension_numbers = #tpu.dot_dimension_numbers<[1], [0], [0], [1], [0, 0, 1, 1], [], []>} : vector<16x32xf32>, vector<32x32xf32>, vector<16x32xf32> -> vector<16x32xf32>
    %35 = arith.addf %33, %34 : vector<16x32xf32>
    %36 = vector.broadcast %8 : vector<1x32xf32> to vector<16x32xf32>
    %37 = arith.addf %35, %36 : vector<16x32xf32>
    %cst_31 = arith.constant 0.000000e+00 : f32
    %38 = vector.broadcast %cst_31 : f32 to vector<16x32xf32>
    %39 = arith.maximumf %37, %38 : vector<16x32xf32>
    %cst_32 = arith.constant dense<0.000000e+00> : vector<16x32xf32>
    %40 = tpu.matmul %39, %9, %cst_32 {dimension_numbers = #tpu.dot_dimension_numbers<[1], [0], [0], [1], [0, 0, 1, 1], [], []>} : vector<16x32xf32>, vector<32x32xf32>, vector<16x32xf32> -> vector<16x32xf32>
    %41 = vector.broadcast %10 : vector<1x32xf32> to vector<16x32xf32>
    %42 = arith.addf %40, %41 : vector<16x32xf32>
    %cst_33 = arith.constant 0.000000e+00 : f32
    %43 = vector.broadcast %cst_33 : f32 to vector<16x32xf32>
    %44 = arith.maximumf %42, %43 : vector<16x32xf32>
    %cst_34 = arith.constant dense<0.000000e+00> : vector<16x32xf32>
    %45 = tpu.matmul %44, %11, %cst_34 {dimension_numbers = #tpu.dot_dimension_numbers<[1], [0], [0], [1], [0, 0, 1, 1], [], []>} : vector<16x32xf32>, vector<32x32xf32>, vector<16x32xf32> -> vector<16x32xf32>
    %46 = vector.broadcast %12 : vector<1x32xf32> to vector<16x32xf32>
    %47 = arith.addf %45, %46 : vector<16x32xf32>
    %48 = vector.extract_strided_slice %47 {offsets = [0, 0], sizes = [16, 4], strides = [1, 1]} : vector<16x32xf32> to vector<16x4xf32>
    %49 = arith.addf %0, %48 : vector<16x4xf32>
    %c0_35 = arith.constant 0 : index
    %c0_36 = arith.constant 0 : index
    %50 = vector.load %arg7[%c0_35, %c0_36] : memref<16x4xf32, #tpu.memory_space<vmem>>, vector<16x4xf32>
    tpu.vector_store %arg7[%c0_35, %c0_36], %49 {strides = array<i32>} : memref<16x4xf32, #tpu.memory_space<vmem>>, vector<16x4xf32>,
    return
  }
  func.func @transform_0(%arg0: i32) -> (i32, i32) {
    %c0_i32 = arith.constant 0 : i32
    %c0_i32_0 = arith.constant 0 : i32
    %c0_i32_1 = arith.constant 0 : i32
    return %c0_i32, %c0_i32_0 : i32, i32
  }
  func.func @transform_1(%arg0: i32) -> (i32, i32) {
    %c0_i32 = arith.constant 0 : i32
    %c0_i32_0 = arith.constant 0 : i32
    %c0_i32_1 = arith.constant 0 : i32
    return %c0_i32, %c0_i32_0 : i32, i32
  }
  func.func @transform_2(%arg0: i32) -> (i32, i32) {
    %c0_i32 = arith.constant 0 : i32
    %c0_i32_0 = arith.constant 0 : i32
    %c0_i32_1 = arith.constant 0 : i32
    return %c0_i32, %c0_i32_0 : i32, i32
  }
  func.func @transform_3(%arg0: i32) -> (i32, i32) {
    %c0_i32 = arith.constant 0 : i32
    %c0_i32_0 = arith.constant 0 : i32
    %c0_i32_1 = arith.constant 0 : i32
    return %c0_i32, %c0_i32_0 : i32, i32
  }
  func.func @transform_4(%arg0: i32) -> (i32, i32) {
    %c0_i32 = arith.constant 0 : i32
    %c0_i32_0 = arith.constant 0 : i32
    %c0_i32_1 = arith.constant 0 : i32
    return %c0_i32, %c0_i32_0 : i32, i32
  }
  func.func @transform_5(%arg0: i32) -> (i32, i32) {
    %c0_i32 = arith.constant 0 : i32
    %c0_i32_0 = arith.constant 0 : i32
    %c0_i32_1 = arith.constant 0 : i32
    return %c0_i32, %c0_i32_0 : i32, i32
  }
  func.func @transform_6(%arg0: i32) -> (i32, i32) {
    %c0_i32 = arith.constant 0 : i32
    %c0_i32_0 = arith.constant 0 : i32
    %c0_i32_1 = arith.constant 0 : i32
    return %c0_i32, %c0_i32_0 : i32, i32
  }
}

</mosaic_0001>

<llo_original>
// kernel: graph_decoder_forward.1
$region0: #{graph_decoder_forward.1}
  #allocation0 [shape = 'u32[]', space=smem, size = 0x4, offset = 0x4, fixed_abs, tag = 'smem constant byte address 0x4 - core index']
  #allocation1 [shape = 'u32[72,128]{1,0:T(1,128)}', space=vmem, size = 0x9000, scoped, tag = 'internal scratch']
  %s0 = inlined_call_operand.vmem [shape: f32[16,4], index: 0, kind: input, shape index: {}]
  %s1 = inlined_call_operand.vmem [shape: f32[112,32], index: 1, kind: input, shape index: {}]
  %s2 = inlined_call_operand.vmem [shape: f32[112,16], index: 2, kind: input, shape index: {}]
  %s3 = inlined_call_operand.vmem [shape: f32[112,16], index: 3, kind: input, shape index: {}]
  %s4 = inlined_call_operand.vmem [shape: f32[16,112], index: 4, kind: input, shape index: {}]
  %s5 = inlined_call_operand.vmem [shape: f32[192,32], index: 5, kind: input, shape index: {}]
  %s6 = inlined_call_operand.vmem [shape: f32[16,4], index: 6, kind: output, shape index: {}]
  %s7 = sld [smem:[#allocation0]]
  $region34: #{graph_decoder_forward.1} parent=0
    _
  %s9 = ssub.s32 1, %s7
  %s10 = scalar_select 0, %s9, %s7
  // Predicated region
  $region2: #{graph_decoder_forward.1} parent=0 // pred_check
    _
  $region3: #{graph_decoder_forward.1} parent=0 // pred_check_branch
    %12 = sbr.rel (0) target = $region5
  $region4: #{graph_decoder_forward.1} parent=0 // pred_region
    _
  $region5: #{graph_decoder_forward.1} parent=0 // pred_fallthru
    _
  // Predicated region
  $region6: #{graph_decoder_forward.1} parent=0 // pred_check
    _
  $region7: #{graph_decoder_forward.1} parent=0 // pred_check_branch
    %14 = sbr.rel (0) target = $region9
  $region8: #{graph_decoder_forward.1} parent=0 // pred_region
    _
  $region9: #{graph_decoder_forward.1} parent=0 // pred_fallthru
    _
  // Predicated region
  $region10: #{graph_decoder_forward.1} parent=0 // pred_check
    _
  $region11: #{graph_decoder_forward.1} parent=0 // pred_check_branch
    %16 = sbr.rel (0) target = $region13
  $region12: #{graph_decoder_forward.1} parent=0 // pred_region
    _
  $region13: #{graph_decoder_forward.1} parent=0 // pred_fallthru
    _
  // Predicated region
  $region14: #{graph_decoder_forward.1} parent=0 // pred_check
    _
  $region15: #{graph_decoder_forward.1} parent=0 // pred_check_branch
    %18 = sbr.rel (0) target = $region17
  $region16: #{graph_decoder_forward.1} parent=0 // pred_region
    _
  $region17: #{graph_decoder_forward.1} parent=0 // pred_fallthru
    _
  // Predicated region
  $region18: #{graph_decoder_forward.1} parent=0 // pred_check
    _
  $region19: #{graph_decoder_forward.1} parent=0 // pred_check_branch
    %20 = sbr.rel (0) target = $region21
  $region20: #{graph_decoder_forward.1} parent=0 // pred_region
    _
  $region21: #{graph_decoder_forward.1} parent=0 // pred_fallthru
    _
  // Predicated region
  $region22: #{graph_decoder_forward.1} parent=0 // pred_check
    _
  $region23: #{graph_decoder_forward.1} parent=0 // pred_check_branch
    %22 = sbr.rel (0) target = $region25
  $region24: #{graph_decoder_forward.1} parent=0 // pred_region
    _
  $region25: #{graph_decoder_forward.1} parent=0 // pred_fallthru
    _
  %v23 = vld [vmem:[%s0] sm:$0xff]
  %v24 = vld [vmem:[%s0 + $0x8] sm:$0xff]
  %v25 = vld [vmem:[%s5] sm:$0xf]
  %v26 = vld [vmem:[%s5 + $0x8] sm:$0xf]
  %v27 = vld [vmem:[%s5 + $0x10] sm:$0x1]
  %v28 = vld [vmem:[%s5 + $0x18] sm:$0xff]
  %v29 = vld [vmem:[%s5 + $0x20] sm:$0xff]
  %v30 = vld [vmem:[%s5 + $0x28] sm:$0xff]
  %v31 = vld [vmem:[%s5 + $0x30] sm:$0xff]
  %v32 = vld [vmem:[%s5 + $0x38] sm:$0x1]
  %v33 = vld [vmem:[%s5 + $0x40] sm:$0xf]
  %v34 = vld [vmem:[%s5 + $0x48] sm:$0xff]
  %v35 = vld [vmem:[%s5 + $0x50] sm:$0xff]
  %v36 = vld [vmem:[%s5 + $0x58] sm:$0xff]
  %v37 = vld [vmem:[%s5 + $0x60] sm:$0xff]
  %v38 = vld [vmem:[%s5 + $0x68] sm:$0x1]
  %v39 = vld [vmem:[%s5 + $0x70] sm:$0xff]
  %v40 = vld [vmem:[%s5 + $0x78] sm:$0xff]
  %v41 = vld [vmem:[%s5 + $0x80] sm:$0xff]
  %v42 = vld [vmem:[%s5 + $0x88] sm:$0xff]
  %v43 = vld [vmem:[%s5 + $0x90] sm:$0x1]
  %v44 = vld [vmem:[%s5 + $0x98] sm:$0xff]
  %v45 = vld [vmem:[%s5 + $0xa0] sm:$0xff]
  %v46 = vld [vmem:[%s5 + $0xa8] sm:$0xff]
  %v47 = vld [vmem:[%s5 + $0xb0] sm:$0xff]
  %v48 = vld [vmem:[%s5 + $0xb8] sm:$0x1]
  %v49 = vld [vmem:[%s2] sm:$0xff]
  %v50 = vld [vmem:[%s2 + $0x8] sm:$0xff]
  %v51 = vld [vmem:[%s2 + $0x10] sm:$0xff]
  %v52 = vld [vmem:[%s2 + $0x18] sm:$0xff]
  %v53 = vld [vmem:[%s2 + $0x20] sm:$0xff]
  %v54 = vld [vmem:[%s2 + $0x28] sm:$0xff]
  %v55 = vld [vmem:[%s2 + $0x30] sm:$0xff]
  %v56 = vld [vmem:[%s2 + $0x38] sm:$0xff]
  %v57 = vld [vmem:[%s2 + $0x40] sm:$0xff]
  %v58 = vld [vmem:[%s2 + $0x48] sm:$0xff]
  %v59 = vld [vmem:[%s2 + $0x50] sm:$0xff]
  %v60 = vld [vmem:[%s2 + $0x58] sm:$0xff]
  %v61 = vld [vmem:[%s2 + $0x60] sm:$0xff]
  %v62 = vld [vmem:[%s2 + $0x68] sm:$0xff]
  %vm63 = vcmask 130048
  %v65 = vsel %vm63, %v49, 0
  %v68 = vsel %vm63, %v50, 0
  %v71 = vsel %vm63, %v51, 0
  %v74 = vsel %vm63, %v52, 0
  %v77 = vsel %vm63, %v53, 0
  %v80 = vsel %vm63, %v54, 0
  %v83 = vsel %vm63, %v55, 0
  %v86 = vsel %vm63, %v56, 0
  %v89 = vsel %vm63, %v57, 0
  %v92 = vsel %vm63, %v58, 0
  %v95 = vsel %vm63, %v59, 0
  %v98 = vsel %vm63, %v60, 0
  %v101 = vsel %vm63, %v61, 0
  %v104 = vsel %vm63, %v62, 0
  %106 = vmatpush.msra.mxu0 0.0
  %107 = vmatpush.msra.mxu0 0.0
  %108 = vmatpush.msra.mxu0 0.0
  %109 = vmatpush.msra.mxu0 0.0
  %110 = vmatpush.msra.mxu0 0.0
  %111 = vmatpush.msra.mxu0 0.0
  %112 = vmatpush.msra.mxu0 0.0
  %113 = vmatpush.msra.mxu0 0.0
  %114 = vmatpush.msra.mxu0 0.0
  %115 = vmatpush.msra.mxu0 0.0
  %116 = vmatpush.msra.mxu0 0.0
  %117 = vmatpush.msra.mxu0 0.0
  %118 = vmatpush.msra.mxu0 0.0
  %119 = vmatpush.msra.mxu0 0.0
  %120 = vmatpush.msra.mxu0 %v24
  %121 = vmatpush.msra.mxu0 %v23
  %122 = vmatmul.f32.gmra.mxu0 %v65
  %v123 = vpop.f32.mrf.mxu0
  %v124 = vadd.f32 0.0, %v123
  %125 = vmatmul.f32.gmra.mxu0 %v68
  %v126 = vpop.f32.mrf.mxu0
  %v127 = vadd.f32 0.0, %v126
  %128 = vmatmul.f32.gmra.mxu0 %v71
  %v129 = vpop.f32.mrf.mxu0
  %v130 = vadd.f32 0.0, %v129
  %131 = vmatmul.f32.gmra.mxu0 %v74
  %v132 = vpop.f32.mrf.mxu0
  %v133 = vadd.f32 0.0, %v132
  %134 = vmatmul.f32.gmra.mxu0 %v77
  %v135 = vpop.f32.mrf.mxu0
  %v136 = vadd.f32 0.0, %v135
  %137 = vmatmul.f32.gmra.mxu0 %v80
  %v138 = vpop.f32.mrf.mxu0
  %v139 = vadd.f32 0.0, %v138
  %140 = vmatmul.f32.gmra.mxu0 %v83
  %v141 = vpop.f32.mrf.mxu0
  %v142 = vadd.f32 0.0, %v141
  %143 = vmatmul.f32.gmra.mxu0 %v86
  %v144 = vpop.f32.mrf.mxu0
  %v145 = vadd.f32 0.0, %v144
  %146 = vmatmul.f32.gmra.mxu0 %v89
  %v147 = vpop.f32.mrf.mxu0
  %v148 = vadd.f32 0.0, %v147
  %149 = vmatmul.f32.gmra.mxu0 %v92
  %v150 = vpop.f32.mrf.mxu0
  %v151 = vadd.f32 0.0, %v150
  %152 = vmatmul.f32.gmra.mxu0 %v95
  %v153 = vpop.f32.mrf.mxu0
  %v154 = vadd.f32 0.0, %v153
  %155 = vmatmul.f32.gmra.mxu0 %v98
  %v156 = vpop.f32.mrf.mxu0
  %v157 = vadd.f32 0.0, %v156
  %158 = vmatmul.f32.gmra.mxu0 %v101
  %v159 = vpop.f32.mrf.mxu0
  %v160 = vadd.f32 0.0, %v159
  %161 = vmatmul.f32.gmra.mxu0 %v104
  %v162 = vpop.f32.mrf.mxu0
  %v163 = vadd.f32 0.0, %v162
  %164 = vdwg.mxu0
  %v165 = vld [vmem:[%s3] sm:$0xff]
  %v166 = vld [vmem:[%s3 + $0x8] sm:$0xff]
  %v167 = vld [vmem:[%s3 + $0x10] sm:$0xff]
  %v168 = vld [vmem:[%s3 + $0x18] sm:$0xff]
  %v169 = vld [vmem:[%s3 + $0x20] sm:$0xff]
  %v170 = vld [vmem:[%s3 + $0x28] sm:$0xff]
  %v171 = vld [vmem:[%s3 + $0x30] sm:$0xff]
  %v172 = vld [vmem:[%s3 + $0x38] sm:$0xff]
  %v173 = vld [vmem:[%s3 + $0x40] sm:$0xff]
  %v174 = vld [vmem:[%s3 + $0x48] sm:$0xff]
  %v175 = vld [vmem:[%s3 + $0x50] sm:$0xff]
  %v176 = vld [vmem:[%s3 + $0x58] sm:$0xff]
  %v177 = vld [vmem:[%s3 + $0x60] sm:$0xff]
  %v178 = vld [vmem:[%s3 + $0x68] sm:$0xff]
  %v180 = vsel %vm63, %v165, 0
  %v183 = vsel %vm63, %v166, 0
  %v186 = vsel %vm63, %v167, 0
  %v189 = vsel %vm63, %v168, 0
  %v192 = vsel %vm63, %v169, 0
  %v195 = vsel %vm63, %v170, 0
  %v198 = vsel %vm63, %v171, 0
  %v201 = vsel %vm63, %v172, 0
  %v204 = vsel %vm63, %v173, 0
  %v207 = vsel %vm63, %v174, 0
  %v210 = vsel %vm63, %v175, 0
  %v213 = vsel %vm63, %v176, 0
  %v216 = vsel %vm63, %v177, 0
  %v219 = vsel %vm63, %v178, 0
  %221 = vmatpush.msra.mxu0 0.0
  %222 = vmatpush.msra.mxu0 0.0
  %223 = vmatpush.msra.mxu0 0.0
  %224 = vmatpush.msra.mxu0 0.0
  %225 = vmatpush.msra.mxu0 0.0
  %226 = vmatpush.msra.mxu0 0.0
  %227 = vmatpush.msra.mxu0 0.0
  %228 = vmatpush.msra.mxu0 0.0
  %229 = vmatpush.msra.mxu0 0.0
  %230 = vmatpush.msra.mxu0 0.0
  %231 = vmatpush.msra.mxu0 0.0
  %232 = vmatpush.msra.mxu0 0.0
  %233 = vmatpush.msra.mxu0 0.0
  %234 = vmatpush.msra.mxu0 0.0
  %235 = vmatpush.msra.mxu0 %v24
  %236 = vmatpush.msra.mxu0 %v23
  %237 = vmatmul.f32.gmra.mxu0 %v180
  %v238 = vpop.f32.mrf.mxu0
  %v239 = vadd.f32 0.0, %v238
  %240 = vmatmul.f32.gmra.mxu0 %v183
  %v241 = vpop.f32.mrf.mxu0
  %v242 = vadd.f32 0.0, %v241
  %243 = vmatmul.f32.gmra.mxu0 %v186
  %v244 = vpop.f32.mrf.mxu0
  %v245 = vadd.f32 0.0, %v244
  %246 = vmatmul.f32.gmra.mxu0 %v189
  %v247 = vpop.f32.mrf.mxu0
  %v248 = vadd.f32 0.0, %v247
  %249 = vmatmul.f32.gmra.mxu0 %v192
  %v250 = vpop.f32.mrf.mxu0
  %v251 = vadd.f32 0.0, %v250
  %252 = vmatmul.f32.gmra.mxu0 %v195
  %v253 = vpop.f32.mrf.mxu0
  %v254 = vadd.f32 0.0, %v253
  %255 = vmatmul.f32.gmra.mxu0 %v198
  %v256 = vpop.f32.mrf.mxu0
  %v257 = vadd.f32 0.0, %v256
  %258 = vmatmul.f32.gmra.mxu0 %v201
  %v259 = vpop.f32.mrf.mxu0
  %v260 = vadd.f32 0.0, %v259
  %261 = vmatmul.f32.gmra.mxu0 %v204
  %v262 = vpop.f32.mrf.mxu0
  %v263 = vadd.f32 0.0, %v262
  %264 = vmatmul.f32.gmra.mxu0 %v207
  %v265 = vpop.f32.mrf.mxu0
  %v266 = vadd.f32 0.0, %v265
  %267 = vmatmul.f32.gmra.mxu0 %v210
  %v268 = vpop.f32.mrf.mxu0
  %v269 = vadd.f32 0.0, %v268
  %270 = vmatmul.f32.gmra.mxu0 %v213
  %v271 = vpop.f32.mrf.mxu0
  %v272 = vadd.f32 0.0, %v271
  %273 = vmatmul.f32.gmra.mxu0 %v216
  %v274 = vpop.f32.mrf.mxu0
  %v275 = vadd.f32 0.0, %v274
  %276 = vmatmul.f32.gmra.mxu0 %v219
  %v277 = vpop.f32.mrf.mxu0
  %v278 = vadd.f32 0.0, %v277
  %279 = vdwg.mxu0
  %vm280 = vcmask 31744
  %v282 = vsel %vm280, %v239, 0
  %v285 = vsel %vm280, %v242, 0
  %v288 = vsel %vm280, %v245, 0
  %v291 = vsel %vm280, %v248, 0
  %v294 = vsel %vm280, %v251, 0
  %v297 = vsel %vm280, %v254, 0
  %v300 = vsel %vm280, %v257, 0
  %v303 = vsel %vm280, %v260, 0
  %v306 = vsel %vm280, %v263, 0
  %v309 = vsel %vm280, %v266, 0
  %v312 = vsel %vm280, %v269, 0
  %v315 = vsel %vm280, %v272, 0
  %v318 = vsel %vm280, %v275, 0
  %v321 = vsel %vm280, %v278, 0
  %vm323 = vcmask 1043456
  %v325 = vsel %vm323, %v26, 0
  %327 = vmatpush.msra.mxu0 0.0
  %328 = vmatpush.msra.mxu0 0.0
  %329 = vmatpush.msra.mxu0 0.0
  %330 = vmatpush.msra.mxu0 0.0
  %331 = vmatpush.msra.mxu0 0.0
  %332 = vmatpush.msra.mxu0 0.0
  %333 = vmatpush.msra.mxu0 0.0
  %334 = vmatpush.msra.mxu0 0.0
  %335 = vmatpush.msra.mxu0 0.0
  %336 = vmatpush.msra.mxu0 0.0
  %337 = vmatpush.msra.mxu0 0.0
  %338 = vmatpush.msra.mxu0 0.0
  %339 = vmatpush.msra.mxu0 0.0
  %340 = vmatpush.msra.mxu0 0.0
  %341 = vmatpush.msra.mxu0 0.0
  %342 = vmatpush.msra.mxu0 %v325
  %343 = vmatmul.f32.gmra.mxu0 %v282
  %v344 = vpop.f32.mrf.mxu0
  %v345 = vadd.f32 0.0, %v344
  %346 = vmatmul.f32.gmra.mxu0 %v285
  %v347 = vpop.f32.mrf.mxu0
  %v348 = vadd.f32 0.0, %v347
  %349 = vmatmul.f32.gmra.mxu0 %v288
  %v350 = vpop.f32.mrf.mxu0
  %v351 = vadd.f32 0.0, %v350
  %352 = vmatmul.f32.gmra.mxu0 %v291
  %v353 = vpop.f32.mrf.mxu0
  %v354 = vadd.f32 0.0, %v353
  %355 = vmatmul.f32.gmra.mxu0 %v294
  %v356 = vpop.f32.mrf.mxu0
  %v357 = vadd.f32 0.0, %v356
  %358 = vmatmul.f32.gmra.mxu0 %v297
  %v359 = vpop.f32.mrf.mxu0
  %v360 = vadd.f32 0.0, %v359
  %361 = vmatmul.f32.gmra.mxu0 %v300
  %v362 = vpop.f32.mrf.mxu0
  %v363 = vadd.f32 0.0, %v362
  %364 = vmatmul.f32.gmra.mxu0 %v303
  %v365 = vpop.f32.mrf.mxu0
  %v366 = vadd.f32 0.0, %v365
  %367 = vmatmul.f32.gmra.mxu0 %v306
  %v368 = vpop.f32.mrf.mxu0
  %v369 = vadd.f32 0.0, %v368
  %370 = vmatmul.f32.gmra.mxu0 %v309
  %v371 = vpop.f32.mrf.mxu0
  %v372 = vadd.f32 0.0, %v371
  %373 = vmatmul.f32.gmra.mxu0 %v312
  %v374 = vpop.f32.mrf.mxu0
  %v375 = vadd.f32 0.0, %v374
  %376 = vmatmul.f32.gmra.mxu0 %v315
  %v377 = vpop.f32.mrf.mxu0
  %v378 = vadd.f32 0.0, %v377
  %379 = vmatmul.f32.gmra.mxu0 %v318
  %v380 = vpop.f32.mrf.mxu0
  %v381 = vadd.f32 0.0, %v380
  %382 = vmatmul.f32.gmra.mxu0 %v321
  %v383 = vpop.f32.mrf.mxu0
  %v384 = vadd.f32 0.0, %v383
  %385 = vdwg.mxu0
  %v387 = vsel %vm280, %v124, 0
  %v390 = vsel %vm280, %v127, 0
  %v393 = vsel %vm280, %v130, 0
  %v396 = vsel %vm280, %v133, 0
  %v399 = vsel %vm280, %v136, 0
  %v402 = vsel %vm280, %v139, 0
  %v405 = vsel %vm280, %v142, 0
  %v408 = vsel %vm280, %v145, 0
  %v411 = vsel %vm280, %v148, 0
  %v414 = vsel %vm280, %v151, 0
  %v417 = vsel %vm280, %v154, 0
  %v420 = vsel %vm280, %v157, 0
  %v423 = vsel %vm280, %v160, 0
  %v426 = vsel %vm280, %v163, 0
  %v429 = vsel %vm323, %v25, 0
  %431 = vmatpush.msra.mxu0 0.0
  %432 = vmatpush.msra.mxu0 0.0
  %433 = vmatpush.msra.mxu0 0.0
  %434 = vmatpush.msra.mxu0 0.0
  %435 = vmatpush.msra.mxu0 0.0
  %436 = vmatpush.msra.mxu0 0.0
  %437 = vmatpush.msra.mxu0 0.0
  %438 = vmatpush.msra.mxu0 0.0
  %439 = vmatpush.msra.mxu0 0.0
  %440 = vmatpush.msra.mxu0 0.0
  %441 = vmatpush.msra.mxu0 0.0
  %442 = vmatpush.msra.mxu0 0.0
  %443 = vmatpush.msra.mxu0 0.0
  %444 = vmatpush.msra.mxu0 0.0
  %445 = vmatpush.msra.mxu0 0.0
  %446 = vmatpush.msra.mxu0 %v429
  %447 = vmatmul.f32.gmra.mxu0 %v387
  %v448 = vpop.f32.mrf.mxu0
  %v449 = vadd.f32 %v345, %v448
  %450 = vmatmul.f32.gmra.mxu0 %v390
  %v451 = vpop.f32.mrf.mxu0
  %v452 = vadd.f32 %v348, %v451
  %453 = vmatmul.f32.gmra.mxu0 %v393
  %v454 = vpop.f32.mrf.mxu0
  %v455 = vadd.f32 %v351, %v454
  %456 = vmatmul.f32.gmra.mxu0 %v396
  %v457 = vpop.f32.mrf.mxu0
  %v458 = vadd.f32 %v354, %v457
  %459 = vmatmul.f32.gmra.mxu0 %v399
  %v460 = vpop.f32.mrf.mxu0
  %v461 = vadd.f32 %v357, %v460
  %462 = vmatmul.f32.gmra.mxu0 %v402
  %v463 = vpop.f32.mrf.mxu0
  %v464 = vadd.f32 %v360, %v463
  %465 = vmatmul.f32.gmra.mxu0 %v405
  %v466 = vpop.f32.mrf.mxu0
  %v467 = vadd.f32 %v363, %v466
  %468 = vmatmul.f32.gmra.mxu0 %v408
  %v469 = vpop.f32.mrf.mxu0
  %v470 = vadd.f32 %v366, %v469
  %471 = vmatmul.f32.gmra.mxu0 %v411
  %v472 = vpop.f32.mrf.mxu0
  %v473 = vadd.f32 %v369, %v472
  %474 = vmatmul.f32.gmra.mxu0 %v414
  %v475 = vpop.f32.mrf.mxu0
  %v476 = vadd.f32 %v372, %v475
  %477 = vmatmul.f32.gmra.mxu0 %v417
  %v478 = vpop.f32.mrf.mxu0
  %v479 = vadd.f32 %v375, %v478
  %480 = vmatmul.f32.gmra.mxu0 %v420
  %v481 = vpop.f32.mrf.mxu0
  %v482 = vadd.f32 %v378, %v481
  %483 = vmatmul.f32.gmra.mxu0 %v423
  %v484 = vpop.f32.mrf.mxu0
  %v485 = vadd.f32 %v381, %v484
  %486 = vmatmul.f32.gmra.mxu0 %v426
  %v487 = vpop.f32.mrf.mxu0
  %v488 = vadd.f32 %v384, %v487
  %489 = vdwg.mxu0
  %v490 = vperm.slane %v27, 0
  %v491 = vadd.f32 %v449, %v490
  %v492 = vadd.f32 %v452, %v490
  %v493 = vadd.f32 %v455, %v490
  %v494 = vadd.f32 %v458, %v490
  %v495 = vadd.f32 %v461, %v490
  %v496 = vadd.f32 %v464, %v490
  %v497 = vadd.f32 %v467, %v490
  %v498 = vadd.f32 %v470, %v490
  %v499 = vadd.f32 %v473, %v490
  %v500 = vadd.f32 %v476, %v490
  %v501 = vadd.f32 %v479, %v490
  %v502 = vadd.f32 %v482, %v490
  %v503 = vadd.f32 %v485, %v490
  %v504 = vadd.f32 %v488, %v490
  %v505 = vmax.f32 %v491, 0.0
  %v506 = vmax.f32 %v492, 0.0
  %v507 = vmax.f32 %v493, 0.0
  %v508 = vmax.f32 %v494, 0.0
  %v509 = vmax.f32 %v495, 0.0
  %v510 = vmax.f32 %v496, 0.0
  %v511 = vmax.f32 %v497, 0.0
  %v512 = vmax.f32 %v498, 0.0
  %v513 = vmax.f32 %v499, 0.0
  %v514 = vmax.f32 %v500, 0.0
  %v515 = vmax.f32 %v501, 0.0
  %v516 = vmax.f32 %v502, 0.0
  %v517 = vmax.f32 %v503, 0.0
  %v518 = vmax.f32 %v504, 0.0
  %v519 = vperm.slane %v32, 0
  %vm520 = vcmask 261120
  %v522 = vsel %vm520, %v505, 0
  %v525 = vsel %vm520, %v506, 0
  %v528 = vsel %vm520, %v507, 0
  %v531 = vsel %vm520, %v508, 0
  %v534 = vsel %vm520, %v509, 0
  %v537 = vsel %vm520, %v510, 0
  %v540 = vsel %vm520, %v511, 0
  %v543 = vsel %vm520, %v512, 0
  %v546 = vsel %vm520, %v513, 0
  %v549 = vsel %vm520, %v514, 0
  %v552 = vsel %vm520, %v515, 0
  %v555 = vsel %vm520, %v516, 0
  %v558 = vsel %vm520, %v517, 0
  %v561 = vsel %vm520, %v518, 0
  %563 = vmatpush.msra.mxu0 0.0
  %564 = vmatpush.msra.mxu0 0.0
  %565 = vmatpush.msra.mxu0 0.0
  %566 = vmatpush.msra.mxu0 0.0
  %567 = vmatpush.msra.mxu0 0.0
  %568 = vmatpush.msra.mxu0 0.0
  %569 = vmatpush.msra.mxu0 0.0
  %570 = vmatpush.msra.mxu0 0.0
  %571 = vmatpush.msra.mxu0 0.0
  %572 = vmatpush.msra.mxu0 0.0
  %573 = vmatpush.msra.mxu0 0.0
  %574 = vmatpush.msra.mxu0 0.0
  %575 = vmatpush.msra.mxu0 %v31
  %576 = vmatpush.msra.mxu0 %v30
  %577 = vmatpush.msra.mxu0 %v29
  %578 = vmatpush.msra.mxu0 %v28
  %579 = vmatmul.f32.gmra.mxu0 %v522
  %v580 = vpop.f32.mrf.mxu0
  %v581 = vadd.f32 %v519, %v580
  %582 = vmatmul.f32.gmra.mxu0 %v525
  %v583 = vpop.f32.mrf.mxu0
  %v584 = vadd.f32 %v519, %v583
  %585 = vmatmul.f32.gmra.mxu0 %v528
  %v586 = vpop.f32.mrf.mxu0
  %v587 = vadd.f32 %v519, %v586
  %588 = vmatmul.f32.gmra.mxu0 %v531
  %v589 = vpop.f32.mrf.mxu0
  %v590 = vadd.f32 %v519, %v589
  %591 = vmatmul.f32.gmra.mxu0 %v534
  %v592 = vpop.f32.mrf.mxu0
  %v593 = vadd.f32 %v519, %v592
  %594 = vmatmul.f32.gmra.mxu0 %v537
  %v595 = vpop.f32.mrf.mxu0
  %v596 = vadd.f32 %v519, %v595
  %597 = vmatmul.f32.gmra.mxu0 %v540
  %v598 = vpop.f32.mrf.mxu0
  %v599 = vadd.f32 %v519, %v598
  %600 = vmatmul.f32.gmra.mxu0 %v543
  %v601 = vpop.f32.mrf.mxu0
  %v602 = vadd.f32 %v519, %v601
  %603 = vmatmul.f32.gmra.mxu0 %v546
  %v604 = vpop.f32.mrf.mxu0
  %v605 = vadd.f32 %v519, %v604
  %606 = vmatmul.f32.gmra.mxu0 %v549
  %v607 = vpop.f32.mrf.mxu0
  %v608 = vadd.f32 %v519, %v607
  %609 = vmatmul.f32.gmra.mxu0 %v552
  %v610 = vpop.f32.mrf.mxu0
  %v611 = vadd.f32 %v519, %v610
  %612 = vmatmul.f32.gmra.mxu0 %v555
  %v613 = vpop.f32.mrf.mxu0
  %v614 = vadd.f32 %v519, %v613
  %615 = vmatmul.f32.gmra.mxu0 %v558
  %v616 = vpop.f32.mrf.mxu0
  %v617 = vadd.f32 %v519, %v616
  %618 = vmatmul.f32.gmra.mxu0 %v561
  %v619 = vpop.f32.mrf.mxu0
  %v620 = vadd.f32 %v519, %v619
  %621 = vdwg.mxu0
  %v622 = vmax.f32 %v581, 0.0
  %v623 = vmax.f32 %v584, 0.0
  %v624 = vmax.f32 %v587, 0.0
  %v625 = vmax.f32 %v590, 0.0
  %v626 = vmax.f32 %v593, 0.0
  %v627 = vmax.f32 %v596, 0.0
  %v628 = vmax.f32 %v599, 0.0
  %v629 = vmax.f32 %v602, 0.0
  %v630 = vmax.f32 %v605, 0.0
  %v631 = vmax.f32 %v608, 0.0
  %v632 = vmax.f32 %v611, 0.0
  %v633 = vmax.f32 %v614, 0.0
  %v634 = vmax.f32 %v617, 0.0
  %v635 = vmax.f32 %v620, 0.0
  %v636 = vld [vmem:[%s1] sm:$0xff]
  %v637 = vld [vmem:[%s1 + $0x8] sm:$0xff]
  %v638 = vld [vmem:[%s1 + $0x10] sm:$0xff]
  %v639 = vld [vmem:[%s1 + $0x18] sm:$0xff]
  %v640 = vld [vmem:[%s1 + $0x20] sm:$0xff]
  %v641 = vld [vmem:[%s1 + $0x28] sm:$0xff]
  %v642 = vld [vmem:[%s1 + $0x30] sm:$0xff]
  %v643 = vld [vmem:[%s1 + $0x38] sm:$0xff]
  %v644 = vld [vmem:[%s1 + $0x40] sm:$0xff]
  %v645 = vld [vmem:[%s1 + $0x48] sm:$0xff]
  %v646 = vld [vmem:[%s1 + $0x50] sm:$0xff]
  %v647 = vld [vmem:[%s1 + $0x58] sm:$0xff]
  %v648 = vld [vmem:[%s1 + $0x60] sm:$0xff]
  %v649 = vld [vmem:[%s1 + $0x68] sm:$0xff]
  %v650 = vmul.f32 %v622, %v636
  %v651 = vmul.f32 %v623, %v637
  %v652 = vmul.f32 %v624, %v638
  %v653 = vmul.f32 %v625, %v639
  %v654 = vmul.f32 %v626, %v640
  %v655 = vmul.f32 %v627, %v641
  %v656 = vmul.f32 %v628, %v642
  %v657 = vmul.f32 %v629, %v643
  %v658 = vmul.f32 %v630, %v644
  %v659 = vmul.f32 %v631, %v645
  %v660 = vmul.f32 %v632, %v646
  %v661 = vmul.f32 %v633, %v647
  %v662 = vmul.f32 %v634, %v648
  %v663 = vmul.f32 %v635, %v649
  %v664 = vld [vmem:[%s4] sm:$0xff]
  %v665 = vld [vmem:[%s4 + $0x8] sm:$0xff]
  %vm666 = vcmask 916480
  %v668 = vsel %vm666, %v664, 0
  %v671 = vsel %vm666, %v665, 0
  %673 = vmatpush.msra.mxu0 0.0
  %674 = vmatpush.msra.mxu0 0.0
  %675 = vmatpush.msra.mxu0 %v663
  %676 = vmatpush.msra.mxu0 %v662
  %677 = vmatpush.msra.mxu0 %v661
  %678 = vmatpush.msra.mxu0 %v660
  %679 = vmatpush.msra.mxu0 %v659
  %680 = vmatpush.msra.mxu0 %v658
  %681 = vmatpush.msra.mxu0 %v657
  %682 = vmatpush.msra.mxu0 %v656
  %683 = vmatpush.msra.mxu0 %v655
  %684 = vmatpush.msra.mxu0 %v654
  %685 = vmatpush.msra.mxu0 %v653
  %686 = vmatpush.msra.mxu0 %v652
  %687 = vmatpush.msra.mxu0 %v651
  %688 = vmatpush.msra.mxu0 %v650
  %689 = vmatmul.f32.gmra.mxu0 %v668
  %v690 = vpop.f32.mrf.mxu0
  %v691 = vadd.f32 0.0, %v690
  %692 = vmatmul.f32.gmra.mxu0 %v671
  %v693 = vpop.f32.mrf.mxu0
  %v694 = vadd.f32 0.0, %v693
  %695 = vdwg.mxu0
  %v697 = vsel %vm520, %v691, 0
  %v700 = vsel %vm520, %v694, 0
  %702 = vmatpush.msra.mxu0 0.0
  %703 = vmatpush.msra.mxu0 0.0
  %704 = vmatpush.msra.mxu0 0.0
  %705 = vmatpush.msra.mxu0 0.0
  %706 = vmatpush.msra.mxu0 0.0
  %707 = vmatpush.msra.mxu0 0.0
  %708 = vmatpush.msra.mxu0 0.0
  %709 = vmatpush.msra.mxu0 0.0
  %710 = vmatpush.msra.mxu0 0.0
  %711 = vmatpush.msra.mxu0 0.0
  %712 = vmatpush.msra.mxu0 0.0
  %713 = vmatpush.msra.mxu0 0.0
  %714 = vmatpush.msra.mxu0 %v37
  %715 = vmatpush.msra.mxu0 %v36
  %716 = vmatpush.msra.mxu0 %v35
  %717 = vmatpush.msra.mxu0 %v34
  %718 = vmatmul.f32.gmra.mxu0 %v697
  %v719 = vpop.f32.mrf.mxu0
  %v720 = vadd.f32 0.0, %v719
  %721 = vmatmul.f32.gmra.mxu0 %v700
  %v722 = vpop.f32.mrf.mxu0
  %v723 = vadd.f32 0.0, %v722
  %724 = vdwg.mxu0
  %v726 = vsel %vm280, %v23, 0
  %v729 = vsel %vm280, %v24, 0
  %v732 = vsel %vm323, %v33, 0
  %734 = vmatpush.msra.mxu0 0.0
  %735 = vmatpush.msra.mxu0 0.0
  %736 = vmatpush.msra.mxu0 0.0
  %737 = vmatpush.msra.mxu0 0.0
  %738 = vmatpush.msra.mxu0 0.0
  %739 = vmatpush.msra.mxu0 0.0
  %740 = vmatpush.msra.mxu0 0.0
  %741 = vmatpush.msra.mxu0 0.0
  %742 = vmatpush.msra.mxu0 0.0
  %743 = vmatpush.msra.mxu0 0.0
  %744 = vmatpush.msra.mxu0 0.0
  %745 = vmatpush.msra.mxu0 0.0
  %746 = vmatpush.msra.mxu0 0.0
  %747 = vmatpush.msra.mxu0 0.0
  %748 = vmatpush.msra.mxu0 0.0
  %749 = vmatpush.msra.mxu0 %v732
  %750 = vmatmul.f32.gmra.mxu0 %v726
  %v751 = vpop.f32.mrf.mxu0
  %v752 = vadd.f32 %v720, %v751
  %753 = vmatmul.f32.gmra.mxu0 %v729
  %v754 = vpop.f32.mrf.mxu0
  %v755 = vadd.f32 %v723, %v754
  %756 = vdwg.mxu0
  %v757 = vperm.slane %v38, 0
  %v758 = vadd.f32 %v752, %v757
  %v759 = vadd.f32 %v755, %v757
  %v760 = vmax.f32 %v758, 0.0
  %v761 = vmax.f32 %v759, 0.0
  %v762 = vperm.slane %v43, 0
  %v764 = vsel %vm520, %v760, 0
  %v767 = vsel %vm520, %v761, 0
  %769 = vmatpush.msra.mxu0 0.0
  %770 = vmatpush.msra.mxu0 0.0
  %771 = vmatpush.msra.mxu0 0.0
  %772 = vmatpush.msra.mxu0 0.0
  %773 = vmatpush.msra.mxu0 0.0
  %774 = vmatpush.msra.mxu0 0.0
  %775 = vmatpush.msra.mxu0 0.0
  %776 = vmatpush.msra.mxu0 0.0
  %777 = vmatpush.msra.mxu0 0.0
  %778 = vmatpush.msra.mxu0 0.0
  %779 = vmatpush.msra.mxu0 0.0
  %780 = vmatpush.msra.mxu0 0.0
  %781 = vmatpush.msra.mxu0 %v42
  %782 = vmatpush.msra.mxu0 %v41
  %783 = vmatpush.msra.mxu0 %v40
  %784 = vmatpush.msra.mxu0 %v39
  %785 = vmatmul.f32.gmra.mxu0 %v764
  %v786 = vpop.f32.mrf.mxu0
  %v787 = vadd.f32 %v762, %v786
  %788 = vmatmul.f32.gmra.mxu0 %v767
  %v789 = vpop.f32.mrf.mxu0
  %v790 = vadd.f32 %v762, %v789
  %791 = vdwg.mxu0
  %v792 = vmax.f32 %v787, 0.0
  %v793 = vmax.f32 %v790, 0.0
  %v794 = vperm.slane %v48, 0
  %v796 = vsel %vm520, %v792, 0
  %v799 = vsel %vm520, %v793, 0
  %801 = vmatpush.msra.mxu0 0.0
  %802 = vmatpush.msra.mxu0 0.0
  %803 = vmatpush.msra.mxu0 0.0
  %804 = vmatpush.msra.mxu0 0.0
  %805 = vmatpush.msra.mxu0 0.0
  %806 = vmatpush.msra.mxu0 0.0
  %807 = vmatpush.msra.mxu0 0.0
  %808 = vmatpush.msra.mxu0 0.0
  %809 = vmatpush.msra.mxu0 0.0
  %810 = vmatpush.msra.mxu0 0.0
  %811 = vmatpush.msra.mxu0 0.0
  %812 = vmatpush.msra.mxu0 0.0
  %813 = vmatpush.msra.mxu0 %v47
  %814 = vmatpush.msra.mxu0 %v46
  %815 = vmatpush.msra.mxu0 %v45
  %816 = vmatpush.msra.mxu0 %v44
  %817 = vmatmul.f32.gmra.mxu0 %v796
  %v818 = vpop.f32.mrf.mxu0
  %v819 = vadd.f32 %v794, %v818
  %820 = vmatmul.f32.gmra.mxu0 %v799
  %v821 = vpop.f32.mrf.mxu0
  %v822 = vadd.f32 %v794, %v821
  %823 = vdwg.mxu0
  %v824 = vadd.f32 %v23, %v819
  %v825 = vadd.f32 %v24, %v822
  %826 = vst.msk [vmem:[%s6] sm:$0xff] %vm280, %v824
  %827 = vst.msk [vmem:[%s6 + $0x8] sm:$0xff] %vm280, %v825
  // Predicated region
  $region26: #{graph_decoder_forward.1} parent=0 // pred_check
    _
  $region27: #{graph_decoder_forward.1} parent=0 // pred_check_branch
    %829 = sbr.rel (0) target = $region29
  $region28: #{graph_decoder_forward.1} parent=0 // pred_region
    _
  $region29: #{graph_decoder_forward.1} parent=0 // pred_fallthru
    _
  // Predicated region
  $region30: #{graph_decoder_forward.1} parent=0 // pred_check
    _
  $region31: #{graph_decoder_forward.1} parent=0 // pred_check_branch
    %831 = sbr.rel (0) target = $region33
  $region32: #{graph_decoder_forward.1} parent=0 // pred_region
    _
  $region33: #{graph_decoder_forward.1} parent=0 // pred_fallthru
    _

</llo_original>
